<compile_context>
chip_gen: v5e
topology: v5e:2x2
jax: 0.10.0
libtpu: 0.0.40
codegen_flags: <defaults>
</compile_context>

<pallas_src>
import functools

import jax
import jax.numpy as jnp
from jax.experimental import pallas as pl
from jax.experimental.pallas import tpu as pltpu

_LANES = 128


def _round_up(n, m):
    return ((n + m - 1) // m) * m


def _cdiv(a, b):
    return (a + b - 1) // b


def _logreg_kernel(x_ref, w_ref, b_ref, o_ref):
    # x_ref: (tb, L)    f32 VMEM -- `pack` original batch rows packed per lane-dense row
    # w_ref: (pack, L)  f32 VMEM -- row k holds w in lanes k*D..(k+1)*D-1, zeros elsewhere
    # b_ref: (1,)       f32 SMEM -- bias scalar
    # o_ref: (pack, tb) f32 VMEM -- o[k, r] = dot(x_orig[pack*r + k], w) + b  (lane-dense)
    s = jax.lax.dot_general(
        w_ref[...],
        x_ref[...],
        dimension_numbers=(((1,), (1,)), ((), ())),  # NT: contract the lane dim of both
        preferred_element_type=jnp.float32,
    )  # (pack, tb)
    o_ref[...] = (s + b_ref[0]).astype(o_ref.dtype)


@functools.partial(jax.jit, static_argnames=("block_b",))
def logistic_regression_forward(x, weights, bias, *, block_b=65536):
    """Pallas equivalent of LogisticRegressionModel.forward.

    x:       [B, D] float32
    weights: [D]    float32
    bias:    [1]    float32
    returns: [B]    float32   (= x @ weights + bias)

    block_b = target number of *original* batch rows processed per grid step.
    """
    B, D = x.shape
    x = x.astype(jnp.float32)
    w = weights.astype(jnp.float32)
    b = bias.astype(jnp.float32).reshape(1)

    # Pack `pack` batch rows per 128-lane VMEM row when D divides 128 (D=32 -> pack=4).
    if D <= _LANES and _LANES % D == 0:
        pack, L = _LANES // D, _LANES
    else:
        pack, L = 1, D  # fallback: feature dim on lanes (padded layout, still correct)

    rows = B // pack          # reshaped rows handled by the kernel
    tail = B - rows * pack    # ragged remainder (< pack original rows)

    if rows == 0:
        # Tiny batch: not worth launching a kernel.
        return jnp.matmul(x, w) + b

    # Free, contiguous reshape to the lane-dense layout (no jnp.pad of the full array).
    x_bulk = x[: rows * pack].reshape(rows, L)

    # Block-diagonal weight LHS: row k holds w in lanes k*D..(k+1)*D-1 (pack*L*4 bytes).
    wmat = jnp.kron(jnp.eye(pack, dtype=jnp.float32), w.reshape(1, D))  # (pack, L)

    # --- tile selection -------------------------------------------------------
    # tb = reshaped rows per grid step; multiple of 128 keeps the output lane-dense,
    # or equal to `rows` for a single full block.
    tb_req = max(_LANES, _round_up(max(block_b, 1) // pack, _LANES))
    if rows <= tb_req:
        tb = rows
    else:
        tb = tb_req
        # Keep >=4 grid steps when there is enough work so v7x megacore gets >=2
        # steps per TensorCore and double-buffering still overlaps.
        if _cdiv(rows, tb) < 4 and rows >= 4 * 1024:
            tb = min(tb, max(1024, _round_up(_cdiv(rows, 4), _LANES)))

    grid = (_cdiv(rows, tb),)

    # Scoped-VMEM budget: x double buffer + output double buffer + weights + slack.
    x_buf = tb * L * 4
    o_buf = pack * tb * 4
    vmem_limit = int(min(max(2 * (x_buf + o_buf) + (2 << 20), 32 << 20), 60 << 20))

    cost = pl.CostEstimate(
        flops=2 * rows * pack * L,
        transcendentals=0,
        bytes_accessed=rows * L * 4 + pack * rows * 4 + pack * L * 4,
    )

    out_pack = pl.pallas_call(
        _logreg_kernel,
        out_shape=jax.ShapeDtypeStruct((pack, rows), jnp.float32),
        grid_spec=pl.GridSpec(
            grid=grid,
            in_specs=[
                # x: streamed / double-buffered lane-dense batch tiles.
                pl.BlockSpec((tb, L), lambda i: (i, 0)),
                # weights: constant index_map -> VMEM-resident across grid steps.
                pl.BlockSpec((pack, L), lambda i: (0, 0)),
                # bias: single scalar in SMEM.
                pl.BlockSpec(memory_space=pltpu.MemorySpace.SMEM),
            ],
            # Lane-dense output: one (pack, tb) slab per grid step.
            out_specs=pl.BlockSpec((pack, tb), lambda i: (0, i)),
        ),
        compiler_params=pltpu.CompilerParams(
            dimension_semantics=("parallel",),  # megacore sharding of the batch axis
            vmem_limit_bytes=vmem_limit,
        ),
        cost_estimate=cost,
    )(x_bulk, wmat, b)

    # Un-interleave (pack, rows) -> (rows*pack,): out[pack*r + k] = out_pack[k, r].
    out_bulk = out_pack.T.reshape(rows * pack)

    if tail:
        # Finish the <pack-row ragged tail with a negligible jnp matvec.
        out_tail = jnp.matmul(x[rows * pack:], w) + b
        return jnp.concatenate([out_bulk, out_tail])
    return out_bulk


if __name__ == "__main__":
    key = jax.random.PRNGKey(0)
    kx, kw, kb = jax.random.split(key, 3)

    # Small shapes consistent with the module: input_dim=32. Batch 1003 exercises
    # multi-step grid, a partial final block, and the ragged (<4 rows) tail path.
    B, D = 1003, 32
    x = jax.random.normal(kx, (B, D), dtype=jnp.float32)
    # The module initializes params to zeros; random values here actually exercise
    # the math (shapes match the nn.Parameter definitions).
    weights = jax.random.normal(kw, (D,), dtype=jnp.float32)
    bias = jax.random.normal(kb, (1,), dtype=jnp.float32)

    # block_b=512 -> tb=128 reshaped rows/step, grid=(2,) at this demo size.
    out = logistic_regression_forward(x, weights, bias, block_b=512)
    out = jax.block_until_ready(out)

    ref = jnp.matmul(x, weights) + bias  # (B,); (1,)-bias broadcasts, matches torch forward
    assert out.shape == (B,)
    assert jnp.allclose(out, ref, atol=1e-4, rtol=1e-4), float(jnp.max(jnp.abs(out - ref)))

    print("KERNEL_OK")
</pallas_src>

<mosaic_0001>
module attributes {stable_mosaic.version = 11 : i64} {
  func.func @_logreg_kernel(%arg0: i32, %arg1: memref<128x128xf32, #tpu.memory_space<vmem>>, %arg2: memref<4x128xf32, #tpu.memory_space<vmem>>, %arg3: memref<1xf32, #tpu.memory_space<smem>>, %arg4: memref<4x128xf32, #tpu.memory_space<vmem>>) attributes {dimension_semantics = [#tpu.dimension_semantics<parallel>], iteration_bounds = array<i64: 2>, scalar_prefetch = 0 : i64, scratch_operands = 0 : i64, tpu.core_type = #tpu.core_type<tc>, window_params = [{transform_indices = @transform_0, window_bounds = array<i64: 128, 128>}, {pipeline_mode = #tpu.pipeline_mode<synchronous>, transform_indices = @transform_1, window_bounds = array<i64: 4, 128>}, {transform_indices = @transform_2, window_bounds = array<i64: 1>}, {transform_indices = @transform_3, window_bounds = array<i64: 4, 128>}]} {
    %c0 = arith.constant 0 : index
    %c0_0 = arith.constant 0 : index
    %0 = vector.load %arg2[%c0, %c0_0] : memref<4x128xf32, #tpu.memory_space<vmem>>, vector<4x128xf32>
    %c0_1 = arith.constant 0 : index
    %c0_2 = arith.constant 0 : index
    %1 = vector.load %arg1[%c0_1, %c0_2] : memref<128x128xf32, #tpu.memory_space<vmem>>, vector<128x128xf32>
    %cst = arith.constant dense<0.000000e+00> : vector<4x128xf32>
    %2 = tpu.matmul %0, %1, %cst {dimension_numbers = #tpu.dot_dimension_numbers<[1], [1], [0], [0], [0, 0, 1, 0], [], []>} : vector<4x128xf32>, vector<128x128xf32>, vector<4x128xf32> -> vector<4x128xf32>
    %c0_3 = arith.constant 0 : index
    %3 = memref.load %arg3[%c0_3] : memref<1xf32, #tpu.memory_space<smem>>
    %4 = vector.broadcast %3 : f32 to vector<4x128xf32>
    %5 = arith.addf %2, %4 : vector<4x128xf32>
    %c0_4 = arith.constant 0 : index
    %c0_5 = arith.constant 0 : index
    %6 = vector.load %arg4[%c0_4, %c0_5] : memref<4x128xf32, #tpu.memory_space<vmem>>, vector<4x128xf32>
    tpu.vector_store %arg4[%c0_4, %c0_5], %5 {strides = array<i32>} : memref<4x128xf32, #tpu.memory_space<vmem>>, vector<4x128xf32>,
    return
  }
  func.func @transform_0(%arg0: i32) -> (i32, i32) {
    %c0_i32 = arith.constant 0 : i32
    %c0_i32_0 = arith.constant 0 : i32
    return %arg0, %c0_i32 : i32, i32
  }
  func.func @transform_1(%arg0: i32) -> (i32, i32) {
    %c0_i32 = arith.constant 0 : i32
    %c0_i32_0 = arith.constant 0 : i32
    %c0_i32_1 = arith.constant 0 : i32
    return %c0_i32, %c0_i32_0 : i32, i32
  }
  func.func @transform_2(%arg0: i32) -> i32 {
    %c0_i32 = arith.constant 0 : i32
    %c0_i32_0 = arith.constant 0 : i32
    return %c0_i32 : i32
  }
  func.func @transform_3(%arg0: i32) -> (i32, i32) {
    %c0_i32 = arith.constant 0 : i32
    %c0_i32_0 = arith.constant 0 : i32
    return %c0_i32, %arg0 : i32, i32
  }
}

</mosaic_0001>

<llo_original>
// kernel: logistic_regression_forward.1
$region0: #{logistic_regression_forward.1}
  #allocation0 [shape = 'u32[]', space=smem, size = 0x4, offset = 0x4, fixed_abs, tag = 'smem constant byte address 0x4 - core index']
  #allocation1 [shape = 'u32[72,128]{1,0:T(1,128)}', space=vmem, size = 0x9000, scoped, tag = 'internal scratch']
  #allocation2 [shape = 'f32[1]{0:T(128)S(6)}', space=smem, size = 0x200, scoped, tag = 'scoped memory for logistic_regression_forward.1']
  %s0 = inlined_call_operand.vmem [shape: f32[250,128], index: 0, kind: input, shape index: {}]
  %s1 = inlined_call_operand.vmem [shape: f32[4,128], index: 1, kind: input, shape index: {}]
  %s2 = inlined_call_operand.<no memory space> [shape: f32[1], index: 2, kind: input, shape index: {}]
  %s3 = inlined_call_operand.vmem [shape: f32[4,250], index: 3, kind: output, shape index: {}]
  %s4 = sld [smem:[#allocation0]]
  $region45: #{logistic_regression_forward.1} parent=0
    _
  %s6 = ssub.s32 1, %s4
  %s7 = scalar_select 0, %s6, %s4
  %8 = sst [smem:[#allocation2]] %s2
  loop: start=0, step=1, limit=4
  $region2: #{logistic_regression_forward.1} parent=0 // loop_pre_header
    _
  $region3: #{logistic_regression_forward.1} parent=0 // loop_header
    %s10 = sphi 0, %s14
    %p11 = scmp.ge.s32.totalorder %s10, 4
    %s20 = sphi 0, %s22
    %s23 = sphi 0, %s20
    %s24 = sphi 0, %s23
    %s40 = sphi 0, %s24
    %s44 = sphi 0, %s44
    %s46 = sphi 0, %s44
    %s47 = sphi 0, %s46
    %s61 = sphi 0, %s47
    %s65 = sphi 0, %s65
    %s67 = sphi 0, %s65
    %s68 = sphi 0, %s67
    %s82 = sphi 0, %s68
    %s88 = sphi 0, %s90
    %s91 = sphi 0, %s88
    %s92 = sphi 0, %s91
    %s108 = sphi 0, %s92
  $region4: #{logistic_regression_forward.1} parent=0 // loop_header_branch
    %13 = sbr.rel (%p11) target = $region8
  $region5: #{logistic_regression_forward.1} parent=0 // loop_body
    %s15 = ssub.s32 %s10, 1
    %s16 = ssub.s32 %s10, 2
    %s17 = sadd.s32 %s10, 1
    %s18 = ssub.s32 %s10, %s17
    %p19 = scmp.eq.s32.totalorder %s18, 0
    %s21 = sadd.s32 %s20, 1
    %s22 = scalar_select %p19, %s20, %s21
    %p25 = pneg %p19
    %p26 = scmp.eq.s32.totalorder %s10, 1
    %p27 = por %p25, %p26
    %p28 = scmp.ne.s32.totalorder %s20, %s23
    %p29 = scmp.eq.s32.totalorder %s10, 0
    %p30 = por %p28, %p29
    %p31 = scmp.ne.s32.totalorder %s20, %s23
    %p32 = scmp.eq.s32.totalorder %s15, 1
    %p33 = por %p31, %p32
    %p34 = scmp.ne.s32.totalorder %s23, %s24
    %p35 = scmp.eq.s32.totalorder %s15, 0
    %p36 = por %p34, %p35
    %p37 = scmp.ne.s32.totalorder %s23, %s24
    %p38 = scmp.eq.s32.totalorder %s16, 1
    %p39 = por %p37, %p38
    %p41 = scmp.ne.s32.totalorder %s24, %s40
    %p42 = scmp.eq.s32.totalorder %s16, 0
    %p43 = por %p41, %p42
    %s45 = sadd.s32 %s44, 1
    %p48 = scmp.eq.s32.totalorder %s10, 1
    %p49 = scmp.ne.s32.totalorder %s44, %s46
    %p50 = scmp.eq.s32.totalorder %s10, 0
    %p51 = por %p49, %p50
    %p52 = scmp.ne.s32.totalorder %s44, %s46
    %p53 = scmp.eq.s32.totalorder %s15, 1
    %p54 = por %p52, %p53
    %p55 = scmp.ne.s32.totalorder %s46, %s47
    %p56 = scmp.eq.s32.totalorder %s15, 0
    %p57 = por %p55, %p56
    %p58 = scmp.ne.s32.totalorder %s46, %s47
    %p59 = scmp.eq.s32.totalorder %s16, 1
    %p60 = por %p58, %p59
    %p62 = scmp.ne.s32.totalorder %s47, %s61
    %p63 = scmp.eq.s32.totalorder %s16, 0
    %p64 = por %p62, %p63
    %s66 = sadd.s32 %s65, 1
    %p69 = scmp.eq.s32.totalorder %s10, 1
    %p70 = scmp.ne.s32.totalorder %s65, %s67
    %p71 = scmp.eq.s32.totalorder %s10, 0
    %p72 = por %p70, %p71
    %p73 = scmp.ne.s32.totalorder %s65, %s67
    %p74 = scmp.eq.s32.totalorder %s15, 1
    %p75 = por %p73, %p74
    %p76 = scmp.ne.s32.totalorder %s67, %s68
    %p77 = scmp.eq.s32.totalorder %s15, 0
    %p78 = por %p76, %p77
    %p79 = scmp.ne.s32.totalorder %s67, %s68
    %p80 = scmp.eq.s32.totalorder %s16, 1
    %p81 = por %p79, %p80
    %p83 = scmp.ne.s32.totalorder %s68, %s82
    %p84 = scmp.eq.s32.totalorder %s16, 0
    %p85 = por %p83, %p84
    %s86 = ssub.s32 %s10, %s17
    %p87 = scmp.eq.s32.totalorder %s86, 0
    %s89 = sadd.s32 %s88, 1
    %s90 = scalar_select %p87, %s88, %s89
    %p93 = pneg %p87
    %p94 = scmp.eq.s32.totalorder %s10, 1
    %p95 = por %p93, %p94
    %p96 = scmp.ne.s32.totalorder %s88, %s91
    %p97 = scmp.eq.s32.totalorder %s10, 0
    %p98 = por %p96, %p97
    %p99 = scmp.ne.s32.totalorder %s88, %s91
    %p100 = scmp.eq.s32.totalorder %s15, 1
    %p101 = por %p99, %p100
    %p102 = scmp.ne.s32.totalorder %s91, %s92
    %p103 = scmp.eq.s32.totalorder %s15, 0
    %p104 = por %p102, %p103
    %p105 = scmp.ne.s32.totalorder %s91, %s92
    %p106 = scmp.eq.s32.totalorder %s16, 1
    %p107 = por %p105, %p106
    %p109 = scmp.ne.s32.totalorder %s92, %s108
    %p110 = scmp.eq.s32.totalorder %s16, 0
    %p111 = por %p109, %p110
    %p112 = scmp.le.s32.totalorder 1, %s10
    %p113 = scmp.lt.s32.totalorder %s10, 3
    %p114 = pnand %p112, %p113
    %p115 = pneg %p114
    // Predicated region
    $region9: #{logistic_regression_forward.1} parent=5 // pred_check
      _
    $region10: #{logistic_regression_forward.1} parent=5 // pred_check_branch
      %117 = sbr.rel (%p114) target = $region12
    $region11: #{logistic_regression_forward.1} parent=5 // pred_region
      %s118 = ssub.s32 %s10, 1
      // Predicated region
      $region13: #{logistic_regression_forward.1} parent=11 // pred_check
        %p119 = pneg %p57
      $region14: #{logistic_regression_forward.1} parent=11 // pred_check_branch
        %121 = sbr.rel (%p119) target = $region16
      $region15: #{logistic_regression_forward.1} parent=11 // pred_region
        _
      $region16: #{logistic_regression_forward.1} parent=11 // pred_fallthru
        _
      // Predicated region
      $region17: #{logistic_regression_forward.1} parent=11 // pred_check
        %p122 = pneg %p78
      $region18: #{logistic_regression_forward.1} parent=11 // pred_check_branch
        %124 = sbr.rel (%p122) target = $region20
      $region19: #{logistic_regression_forward.1} parent=11 // pred_region
        _
      $region20: #{logistic_regression_forward.1} parent=11 // pred_fallthru
        _
    $region12: #{logistic_regression_forward.1} parent=5 // pred_fallthru
      _
    %p125 = scmp.lt.s32.totalorder %s10, 2
    // Predicated region
    $region21: #{logistic_regression_forward.1} parent=5 // pred_check
      %p126 = pneg %p125
    $region22: #{logistic_regression_forward.1} parent=5 // pred_check_branch
      %128 = sbr.rel (%p126) target = $region24
    $region23: #{logistic_regression_forward.1} parent=5 // pred_region
      // Predicated region
      $region25: #{logistic_regression_forward.1} parent=23 // pred_check
        %p129 = pneg %p30
      $region26: #{logistic_regression_forward.1} parent=23 // pred_check_branch
        %131 = sbr.rel (%p129) target = $region28
      $region27: #{logistic_regression_forward.1} parent=23 // pred_region
        %s132 = smul.u32 16, %s10
        %p133 = scmp.lt.s32.totalorder %s132, 31
        %s134 = scalar_select %p133, %s132, 31
        %s135 = smul.addr %s134, 8
        %s136 = scalar_lea.vmem %s0, %s135
        %s137 = smul.u32 16, %s10
      $region28: #{logistic_regression_forward.1} parent=23 // pred_fallthru
        _
    $region24: #{logistic_regression_forward.1} parent=5 // pred_fallthru
      _
    %p138 = scmp.le.s32.totalorder 1, %s10
    %p139 = scmp.lt.s32.totalorder %s10, 3
    %p140 = pnand %p138, %p139
    %p141 = pneg %p140
    // Predicated region
    $region29: #{logistic_regression_forward.1} parent=5 // pred_check
      _
    $region30: #{logistic_regression_forward.1} parent=5 // pred_check_branch
      %143 = sbr.rel (%p140) target = $region32
    $region31: #{logistic_regression_forward.1} parent=5 // pred_region
      %s144 = ssub.s32 %s10, 1
      %s145 = smul.u32 16, %s15
      %p146 = scmp.lt.s32.totalorder %s145, 31
      %s147 = scalar_select %p146, %s145, 31
      %s148 = smul.addr %s147, 8
      %s149 = scalar_lea.vmem %s0, %s148
      %p150 = pneg %p36
      %p151 = pneg %p33
      %p152 = pneg %p57
      %p153 = pneg %p54
      %p154 = pneg %p78
      %p155 = pneg %p75
      %p156 = pneg %p104
      %p157 = pneg %p101
      %p158 = scmp.lt.s32.totalorder %s15, 1
      %s159 = scalar_select %p158, %s15, 1
      %s160 = smul.addr %s159, 4
      %s161 = scalar_lea.vmem %s3, %s160
      %s162 = smul.u32 16, %s15
      %p163 = scmp.lt.s32.totalorder %s162, 31
      %s164 = scalar_select %p163, %s162, 31
      %s165 = smul.addr %s164, 8
      %s166 = scalar_lea.vmem %s0, %s165
      %s167 = smul.u32 16, %s15
      %p168 = scmp.lt.s32.totalorder %s15, 1
      %s169 = scalar_select %p168, %s15, 1
      %s170 = smul.addr %s169, 4
      %s171 = scalar_lea.vmem %s3, %s170
      %v172 = vld [vmem:[%s1] sm:$0xf]
      %v173 = vld [vmem:[%s166] sm:$0xff]
      %v174 = vld [vmem:[%s166 + $0x8] sm:$0xff]
      %v175 = vld [vmem:[%s166 + $0x10] sm:$0xff]
      %v176 = vld [vmem:[%s166 + $0x18] sm:$0xff]
      %v177 = vld [vmem:[%s166 + $0x20] sm:$0xff]
      %v178 = vld [vmem:[%s166 + $0x28] sm:$0xff]
      %v179 = vld [vmem:[%s166 + $0x30] sm:$0xff]
      %v180 = vld [vmem:[%s166 + $0x38] sm:$0xff]
      %v181 = vld [vmem:[%s166 + $0x40] sm:$0xff]
      %v182 = vld [vmem:[%s166 + $0x48] sm:$0xff]
      %v183 = vld [vmem:[%s166 + $0x50] sm:$0xff]
      %v184 = vld [vmem:[%s166 + $0x58] sm:$0xff]
      %v185 = vld [vmem:[%s166 + $0x60] sm:$0xff]
      %v186 = vld [vmem:[%s166 + $0x68] sm:$0xff]
      %v187 = vld [vmem:[%s166 + $0x70] sm:$0xff]
      %v188 = vld [vmem:[%s166 + $0x78] sm:$0xff]
      %s189 = sld [smem:[#allocation2]]
      %v190 = vstv %s189
      %191 = vmatpush.xpose.msra.mxu0 %v188
      %192 = vmatpush.xpose.msra.mxu0 %v187
      %193 = vmatpush.xpose.msra.mxu0 %v186
      %194 = vmatpush.xpose.msra.mxu0 %v185
      %195 = vmatpush.xpose.msra.mxu0 %v184
      %196 = vmatpush.xpose.msra.mxu0 %v183
      %197 = vmatpush.xpose.msra.mxu0 %v182
      %198 = vmatpush.xpose.msra.mxu0 %v181
      %199 = vmatpush.xpose.msra.mxu0 %v180
      %200 = vmatpush.xpose.msra.mxu0 %v179
      %201 = vmatpush.xpose.msra.mxu0 %v178
      %202 = vmatpush.xpose.msra.mxu0 %v177
      %203 = vmatpush.xpose.msra.mxu0 %v176
      %204 = vmatpush.xpose.msra.mxu0 %v175
      %205 = vmatpush.xpose.msra.mxu0 %v174
      %206 = vmatpush.xpose.msra.mxu0 %v173
      %207 = vmatmul.f32.gmra.mxu0 %v172
      %v208 = vpop.f32.mrf.mxu0
      %v209 = vadd.f32 %v190, %v208
      %210 = vdwg.mxu0
      %211 = vst [vmem:[%s171] sm:$0xf] %v209
      %p212 = scmp.lt.s32.totalorder %s15, 1
      %s213 = scalar_select %p212, %s15, 1
      %s214 = smul.addr %s213, 4
      %s215 = scalar_lea.vmem %s3, %s214
      // Predicated region
      $region33: #{logistic_regression_forward.1} parent=31 // pred_check
        %p216 = pneg %p101
      $region34: #{logistic_regression_forward.1} parent=31 // pred_check_branch
        %218 = sbr.rel (%p216) target = $region36
      $region35: #{logistic_regression_forward.1} parent=31 // pred_region
        _
      $region36: #{logistic_regression_forward.1} parent=31 // pred_fallthru
        _
    $region32: #{logistic_regression_forward.1} parent=5 // pred_fallthru
      _
    %p219 = scmp.le.s32.totalorder 2, %s10
    // Predicated region
    $region37: #{logistic_regression_forward.1} parent=5 // pred_check
      %p220 = pneg %p219
    $region38: #{logistic_regression_forward.1} parent=5 // pred_check_branch
      %222 = sbr.rel (%p220) target = $region40
    $region39: #{logistic_regression_forward.1} parent=5 // pred_region
      %s223 = ssub.s32 %s10, 2
      // Predicated region
      $region41: #{logistic_regression_forward.1} parent=39 // pred_check
        %p224 = pneg %p107
      $region42: #{logistic_regression_forward.1} parent=39 // pred_check_branch
        %226 = sbr.rel (%p224) target = $region44
      $region43: #{logistic_regression_forward.1} parent=39 // pred_region
        %p227 = scmp.lt.s32.totalorder %s16, 1
        %s228 = scalar_select %p227, %s16, 1
        %s229 = smul.addr %s228, 4
        %s230 = scalar_lea.vmem %s3, %s229
      $region44: #{logistic_regression_forward.1} parent=39 // pred_fallthru
        _
    $region40: #{logistic_regression_forward.1} parent=5 // pred_fallthru
      _
  $region6: #{logistic_regression_forward.1} parent=0 // loop_footer
    %s14 = sadd.s32 1, %s10
  $region7: #{logistic_regression_forward.1} parent=0 // loop_footer_branch
    %9 = sbr.rel target = $region3
  $region8: #{logistic_regression_forward.1} parent=0 // loop_exit
    _

</llo_original>
